<compile_context>
chip_gen: v5e
topology: v5e:2x2
jax: 0.10.0
libtpu: 0.0.40
codegen_flags: <defaults>
</compile_context>

<pallas_src>
import math

import numpy as np

import jax
import jax.numpy as jnp
from jax.experimental import pallas as pl
from jax.experimental.pallas import tpu as pltpu


_HALO = 128  # lane-aligned halo width; must cover K//2 - 1 shifted taps


def _round_up(x: int, m: int) -> int:
    return ((x + m - 1) // m) * m


def _cdiv(a: int, b: int) -> int:
    return -(-a // b)


# ---------------------------------------------------------------------------
# Filter construction (matches BigVGAN kaiser_sinc_filter1d; deterministic,
# not learned -> host-side numpy so taps can be baked as immediates).
# ---------------------------------------------------------------------------
def kaiser_sinc_filter1d(cutoff: float, half_width: float, kernel_size: int) -> np.ndarray:
    even = kernel_size % 2 == 0
    half_size = kernel_size // 2

    delta_f = 4.0 * half_width
    A = 2.285 * (half_size - 1) * math.pi * delta_f + 7.95
    if A > 50.0:
        beta = 0.1102 * (A - 8.7)
    elif A >= 21.0:
        beta = 0.5842 * (A - 21.0) ** 0.4 + 0.07886 * (A - 21.0)
    else:
        beta = 0.0

    # np.kaiser == torch.kaiser_window(..., periodic=False)
    window = np.kaiser(kernel_size, beta)

    if even:
        time = np.arange(-half_size, half_size, dtype=np.float64) + 0.5
    else:
        time = np.arange(kernel_size, dtype=np.float64) - half_size

    if cutoff == 0:
        filt = np.zeros_like(time)
    else:
        filt = 2.0 * cutoff * window * np.sinc(2.0 * cutoff * time)
        filt = filt / filt.sum()
    return filt.astype(np.float32)  # (kernel_size,)


# ---------------------------------------------------------------------------
# Pallas kernel: polyphase depthwise conv (stride 2).
#   out[r, i] = sum_j x0[r, i+j] * w[2j] + x1[r, i+j] * w[2j+1]
# Main region: shifts realized as pltpu.roll on the current block only (valid
# except the last <=K/2-1 columns).  Tail region (last 128 columns): computed
# from a small (r_tile, 256) [last-128-cols | halo] strip.  Symmetric taps are
# folded so only K/2 multiplies per output are needed.
# ---------------------------------------------------------------------------
def _make_lowpass_kernel(taps, t_tile: int):
    w = tuple(float(t) for t in taps)
    n_half = len(w) // 2
    w_even = w[0::2]  # taps hitting the even polyphase
    w_odd = w[1::2]   # taps hitting the odd polyphase
    symmetric = all(
        abs(w_odd[j] - w_even[n_half - 1 - j]) < 1e-12 for j in range(n_half)
    )

    def accum(x0, x1, out_width):
        """acc[:, i] = sum_j x0[:, i+j]*w_even[j] + x1[:, i+j]*w_odd[j].

        Valid for i < width - (n_half - 1); when out_width == width the last
        few columns wrap around (callers never store those columns).
        """
        width = x0.shape[-1]

        def shifted(x, j):
            v = x if j == 0 else pltpu.roll(x, width - j, axis=1)
            if out_width < width:
                v = v[:, :out_width]        # lane-aligned slice before the FMA
            return v.astype(jnp.float32)

        acc = None
        if symmetric:
            # w_odd[j] == w_even[n_half-1-j]  ->  pair the two phases.
            for j in range(n_half):
                pair = shifted(x0, j) + shifted(x1, n_half - 1 - j)
                term = pair * w_even[j]
                acc = term if acc is None else acc + term
        else:
            for j in range(n_half):
                t0 = shifted(x0, j) * w_even[j]
                t1 = shifted(x1, j) * w_odd[j]
                acc = (t0 + t1) if acc is None else acc + t0 + t1
        return acc

    def lowpass_kernel(x0c_ref, x0h_ref, x1c_ref, x1h_ref, o_ref):
        x0 = x0c_ref[...]   # (r_tile, t_tile), native dtype
        x1 = x1c_ref[...]

        # ---- tail: last 128 output columns need the halo block -------------
        t0 = jnp.concatenate([x0[:, t_tile - 128:], x0h_ref[...]], axis=-1)  # (r, 256)
        t1 = jnp.concatenate([x1[:, t_tile - 128:], x1h_ref[...]], axis=-1)
        acc_tail = accum(t0, t1, 128)                                        # (r, 128)

        # ---- main: rolls on the current block only --------------------------
        if t_tile > 128:
            acc_main = accum(x0, x1, t_tile)   # last <=5 cols garbage, not stored
            o_ref[:, : t_tile - 128] = acc_main[:, : t_tile - 128].astype(o_ref.dtype)
        o_ref[:, t_tile - 128:] = acc_tail.astype(o_ref.dtype)

    return lowpass_kernel


class DownSample1d:
    """JAX/Pallas port of DownSample1d (ratio=2 default)."""

    def __init__(self, ratio: int = 2, kernel_size=None, *, r_tile: int = 256,
                 t_tile: int = 2048):
        self.ratio = ratio
        self.kernel_size = int(6 * ratio // 2) * 2 if kernel_size is None else kernel_size
        self.stride = ratio
        self.even = self.kernel_size % 2 == 0
        self.pad_left = self.kernel_size // 2 - int(self.even)
        self.pad_right = self.kernel_size // 2
        self.filter_np = kaiser_sinc_filter1d(
            cutoff=0.5 / ratio, half_width=0.6 / ratio, kernel_size=self.kernel_size
        )
        self.filter = jnp.asarray(self.filter_np)

        assert self.stride == 2 and self.even, \
            "Pallas kernel implemented for ratio=2 (stride 2, even K)."
        assert self.kernel_size // 2 - 1 <= _HALO, "halo block too small for this K"
        assert r_tile % 8 == 0 and t_tile % 128 == 0, "tiles must be (8,128)-aligned"
        self.r_tile = r_tile
        self.t_tile = t_tile

    def __call__(self, x: jnp.ndarray) -> jnp.ndarray:
        # x: [B, C, T]
        assert x.ndim == 3
        B, C, T = x.shape
        K = self.kernel_size
        t_out = (T + self.pad_left + self.pad_right - K) // self.stride + 1
        R = B * C

        # --- tiling: shrink & balance tiles so padding waste < 1 tile --------
        n_t = _cdiv(t_out, self.t_tile)
        t_tile = _round_up(_cdiv(t_out, n_t), 128)
        n_r = _cdiv(R, self.r_tile)
        r_tile = _round_up(_cdiv(R, n_r), 8)
        r_padded = n_r * r_tile
        l_padded = n_t * t_tile + _HALO          # per-phase width incl. last halo

        # --- ONE fused pre-pass: edge pad (conv pad + parity + tile/halo pad
        # + row pad) in a single jnp.pad, then a free row-major reshape and two
        # strided slices for the polyphase split.  Edge replication (rather
        # than zeros) keeps every column the kernel may touch finite and keeps
        # the valid-output columns identical to F.pad(mode='replicate').
        x2d = x.reshape(R, T)
        w_needed = 2 * l_padded
        x_pad = jnp.pad(
            x2d,
            ((0, r_padded - R), (self.pad_left, w_needed - T - self.pad_left)),
            mode="edge",
        )
        xp = x_pad.reshape(r_padded, l_padded, 2)   # free view of the padded rows
        x0 = xp[:, :, 0]    # even polyphase
        x1 = xp[:, :, 1]    # odd polyphase
        # TODO(synk): fusing this de-interleave into the kernel (interleaved
        # blocks + in-VMEM lane de-interleave) would save ~1 more HBM pass.

        th = t_tile // 128  # halo spec's block-index scale (its blocks are 128 wide)

        out = pl.pallas_call(
            _make_lowpass_kernel(self.filter_np, t_tile),
            out_shape=jax.ShapeDtypeStruct((r_padded, n_t * t_tile), x.dtype),
            grid_spec=pltpu.PrefetchScalarGridSpec(
                num_scalar_prefetch=0,
                grid=(n_r, n_t),
                in_specs=[
                    # even phase: current block + 128-lane halo (next columns)
                    pl.BlockSpec((r_tile, t_tile), lambda r, t: (r, t)),
                    pl.BlockSpec((r_tile, _HALO), lambda r, t: (r, (t + 1) * th)),
                    # odd phase: current block + halo
                    pl.BlockSpec((r_tile, t_tile), lambda r, t: (r, t)),
                    pl.BlockSpec((r_tile, _HALO), lambda r, t: (r, (t + 1) * th)),
                ],
                out_specs=pl.BlockSpec((r_tile, t_tile), lambda r, t: (r, t)),
            ),
            compiler_params=pltpu.CompilerParams(
                dimension_semantics=("parallel", "parallel"),
                vmem_limit_bytes=48 * 1024 * 1024,
            ),
        )(x0, x0, x1, x1)

        if r_padded == R and n_t * t_tile == t_out:
            return out.reshape(B, C, t_out)           # no post-kernel slice pass
        return out[:R, :t_out].reshape(B, C, t_out)


def _reference(x, filt, pad_left, pad_right, stride):
    """Pure-JAX f32 reference (VPU only; avoids MXU conv precision issues)."""
    xp = jnp.pad(x, ((0, 0), (0, 0), (pad_left, pad_right)), mode="edge")
    K = filt.shape[0]
    Tp = xp.shape[-1]
    t_out = (Tp - K) // stride + 1
    idx = stride * jnp.arange(t_out)[:, None] + jnp.arange(K)[None, :]
    win = xp[:, :, idx].astype(jnp.float32)            # (B, C, t_out, K)
    return jnp.sum(win * filt.astype(jnp.float32), axis=-1)


def _check(mod, x, atol=3e-5, rtol=1e-5):
    y = jax.block_until_ready(mod(x))
    y_ref = _reference(x, mod.filter, mod.pad_left, mod.pad_right, mod.stride)
    assert y.shape == y_ref.shape, (y.shape, y_ref.shape)
    err = float(jnp.max(jnp.abs(y.astype(jnp.float32) - y_ref)))
    assert jnp.allclose(y.astype(jnp.float32), y_ref, atol=atol, rtol=rtol), err
    return y


if __name__ == "__main__":
    key = jax.random.PRNGKey(0)
    k1, k2, k3 = jax.random.split(key, 3)

    # 1) Small shape from the module spec (single grid cell, t_tile==128 path).
    mod = DownSample1d(ratio=2)
    x = jax.random.normal(k1, (2, 4, 16), dtype=jnp.float32)
    _check(mod, x)

    # 2) Multi-block grid (rows x time = 2 x 3), exercises the halo path with
    #    the minimal 128-wide time tiles.
    mod2 = DownSample1d(ratio=2, r_tile=8, t_tile=128)
    x2 = jax.random.normal(k2, (2, 8, 600), dtype=jnp.float32)
    _check(mod2, x2)

    # 3) t_tile > 128 (main + tail split), odd T (parity handling), padded rows.
    mod3 = DownSample1d(ratio=2, r_tile=8, t_tile=256)
    x3 = jax.random.normal(k3, (2, 3, 1031), dtype=jnp.float32)
    _check(mod3, x3)

    print("KERNEL_OK")
</pallas_src>

<mosaic_0001>
module attributes {stable_mosaic.version = 11 : i64} {
  func.func @lowpass_kernel(%arg0: i32, %arg1: i32, %arg2: memref<8x128xf32, #tpu.memory_space<vmem>>, %arg3: memref<8x128xf32, #tpu.memory_space<vmem>>, %arg4: memref<8x128xf32, #tpu.memory_space<vmem>>, %arg5: memref<8x128xf32, #tpu.memory_space<vmem>>, %arg6: memref<8x128xf32, #tpu.memory_space<vmem>>) attributes {dimension_semantics = [#tpu.dimension_semantics<parallel>, #tpu.dimension_semantics<parallel>], iteration_bounds = array<i64: 1, 1>, scalar_prefetch = 0 : i64, scratch_operands = 0 : i64, tpu.core_type = #tpu.core_type<tc>, window_params = [{transform_indices = @transform_0, window_bounds = array<i64: 8, 128>}, {transform_indices = @transform_1, window_bounds = array<i64: 8, 128>}, {transform_indices = @transform_2, window_bounds = array<i64: 8, 128>}, {transform_indices = @transform_3, window_bounds = array<i64: 8, 128>}, {transform_indices = @transform_4, window_bounds = array<i64: 8, 128>}]} {
    %c0 = arith.constant 0 : index
    %c0_0 = arith.constant 0 : index
    %0 = vector.load %arg2[%c0, %c0_0] : memref<8x128xf32, #tpu.memory_space<vmem>>, vector<8x128xf32>
    %c0_1 = arith.constant 0 : index
    %c0_2 = arith.constant 0 : index
    %1 = vector.load %arg4[%c0_1, %c0_2] : memref<8x128xf32, #tpu.memory_space<vmem>>, vector<8x128xf32>
    %c0_3 = arith.constant 0 : index
    %c0_4 = arith.constant 0 : index
    %2 = vector.load %arg3[%c0_3, %c0_4] : memref<8x128xf32, #tpu.memory_space<vmem>>, vector<8x128xf32>
    %3 = tpu.concatenate %0, %2 in 1 : vector<8x128xf32>, vector<8x128xf32> -> vector<8x256xf32>
    %c0_5 = arith.constant 0 : index
    %c0_6 = arith.constant 0 : index
    %4 = vector.load %arg5[%c0_5, %c0_6] : memref<8x128xf32, #tpu.memory_space<vmem>>, vector<8x128xf32>
    %5 = tpu.concatenate %1, %4 in 1 : vector<8x128xf32>, vector<8x128xf32> -> vector<8x256xf32>
    %6 = vector.extract_strided_slice %3 {offsets = [0, 0], sizes = [8, 128], strides = [1, 1]} : vector<8x256xf32> to vector<8x128xf32>
    %c251_i32 = arith.constant 251 : i32
    %7 = tpu.dynamic_rotate %5 by %c251_i32 dim 1 : vector<8x256xf32>, i32 -> vector<8x256xf32>
    %8 = vector.extract_strided_slice %7 {offsets = [0, 0], sizes = [8, 128], strides = [1, 1]} : vector<8x256xf32> to vector<8x128xf32>
    %9 = arith.addf %6, %8 : vector<8x128xf32>
    %cst = arith.constant 0.00202896656 : f32
    %10 = vector.broadcast %cst : f32 to vector<8x128xf32>
    %11 = arith.mulf %9, %10 : vector<8x128xf32>
    %c255_i32 = arith.constant 255 : i32
    %12 = tpu.dynamic_rotate %3 by %c255_i32 dim 1 : vector<8x256xf32>, i32 -> vector<8x256xf32>
    %13 = vector.extract_strided_slice %12 {offsets = [0, 0], sizes = [8, 128], strides = [1, 1]} : vector<8x256xf32> to vector<8x128xf32>
    %c252_i32 = arith.constant 252 : i32
    %14 = tpu.dynamic_rotate %5 by %c252_i32 dim 1 : vector<8x256xf32>, i32 -> vector<8x256xf32>
    %15 = vector.extract_strided_slice %14 {offsets = [0, 0], sizes = [8, 128], strides = [1, 1]} : vector<8x256xf32> to vector<8x128xf32>
    %16 = arith.addf %13, %15 : vector<8x128xf32>
    %cst_7 = arith.constant -0.0255434643 : f32
    %17 = vector.broadcast %cst_7 : f32 to vector<8x128xf32>
    %18 = arith.mulf %16, %17 : vector<8x128xf32>
    %19 = arith.addf %11, %18 : vector<8x128xf32>
    %c254_i32 = arith.constant 254 : i32
    %20 = tpu.dynamic_rotate %3 by %c254_i32 dim 1 : vector<8x256xf32>, i32 -> vector<8x256xf32>
    %21 = vector.extract_strided_slice %20 {offsets = [0, 0], sizes = [8, 128], strides = [1, 1]} : vector<8x256xf32> to vector<8x128xf32>
    %c253_i32 = arith.constant 253 : i32
    %22 = tpu.dynamic_rotate %5 by %c253_i32 dim 1 : vector<8x256xf32>, i32 -> vector<8x256xf32>
    %23 = vector.extract_strided_slice %22 {offsets = [0, 0], sizes = [8, 128], strides = [1, 1]} : vector<8x256xf32> to vector<8x128xf32>
    %24 = arith.addf %21, %23 : vector<8x128xf32>
    %cst_8 = arith.constant 0.128572613 : f32
    %25 = vector.broadcast %cst_8 : f32 to vector<8x128xf32>
    %26 = arith.mulf %24, %25 : vector<8x128xf32>
    %27 = arith.addf %19, %26 : vector<8x128xf32>
    %c253_i32_9 = arith.constant 253 : i32
    %28 = tpu.dynamic_rotate %3 by %c253_i32_9 dim 1 : vector<8x256xf32>, i32 -> vector<8x256xf32>
    %29 = vector.extract_strided_slice %28 {offsets = [0, 0], sizes = [8, 128], strides = [1, 1]} : vector<8x256xf32> to vector<8x128xf32>
    %c254_i32_10 = arith.constant 254 : i32
    %30 = tpu.dynamic_rotate %5 by %c254_i32_10 dim 1 : vector<8x256xf32>, i32 -> vector<8x256xf32>
    %31 = vector.extract_strided_slice %30 {offsets = [0, 0], sizes = [8, 128], strides = [1, 1]} : vector<8x256xf32> to vector<8x128xf32>
    %32 = arith.addf %29, %31 : vector<8x128xf32>
    %cst_11 = arith.constant 0.443209797 : f32
    %33 = vector.broadcast %cst_11 : f32 to vector<8x128xf32>
    %34 = arith.mulf %32, %33 : vector<8x128xf32>
    %35 = arith.addf %27, %34 : vector<8x128xf32>
    %c252_i32_12 = arith.constant 252 : i32
    %36 = tpu.dynamic_rotate %3 by %c252_i32_12 dim 1 : vector<8x256xf32>, i32 -> vector<8x256xf32>
    %37 = vector.extract_strided_slice %36 {offsets = [0, 0], sizes = [8, 128], strides = [1, 1]} : vector<8x256xf32> to vector<8x128xf32>
    %c255_i32_13 = arith.constant 255 : i32
    %38 = tpu.dynamic_rotate %5 by %c255_i32_13 dim 1 : vector<8x256xf32>, i32 -> vector<8x256xf32>
    %39 = vector.extract_strided_slice %38 {offsets = [0, 0], sizes = [8, 128], strides = [1, 1]} : vector<8x256xf32> to vector<8x128xf32>
    %40 = arith.addf %37, %39 : vector<8x128xf32>
    %cst_14 = arith.constant -0.0576573759 : f32
    %41 = vector.broadcast %cst_14 : f32 to vector<8x128xf32>
    %42 = arith.mulf %40, %41 : vector<8x128xf32>
    %43 = arith.addf %35, %42 : vector<8x128xf32>
    %c251_i32_15 = arith.constant 251 : i32
    %44 = tpu.dynamic_rotate %3 by %c251_i32_15 dim 1 : vector<8x256xf32>, i32 -> vector<8x256xf32>
    %45 = vector.extract_strided_slice %44 {offsets = [0, 0], sizes = [8, 128], strides = [1, 1]} : vector<8x256xf32> to vector<8x128xf32>
    %46 = vector.extract_strided_slice %5 {offsets = [0, 0], sizes = [8, 128], strides = [1, 1]} : vector<8x256xf32> to vector<8x128xf32>
    %47 = arith.addf %45, %46 : vector<8x128xf32>
    %cst_16 = arith.constant 0.00938946381 : f32
    %48 = vector.broadcast %cst_16 : f32 to vector<8x128xf32>
    %49 = arith.mulf %47, %48 : vector<8x128xf32>
    %50 = arith.addf %43, %49 : vector<8x128xf32>
    %c0_17 = arith.constant 0 : index
    %c0_18 = arith.constant 0 : index
    %51 = vector.load %arg6[%c0_17, %c0_18] : memref<8x128xf32, #tpu.memory_space<vmem>>, vector<8x128xf32>
    tpu.vector_store %arg6[%c0_17, %c0_18], %50 {strides = array<i32>} : memref<8x128xf32, #tpu.memory_space<vmem>>, vector<8x128xf32>,
    return
  }
  func.func @transform_0(%arg0: i32, %arg1: i32) -> (i32, i32) {
    %c0_i32 = arith.constant 0 : i32
    return %arg0, %arg1 : i32, i32
  }
  func.func @transform_1(%arg0: i32, %arg1: i32) -> (i32, i32) {
    %c1_i32 = arith.constant 1 : i32
    %0 = arith.addi %arg1, %c1_i32 : i32
    %c1_i32_0 = arith.constant 1 : i32
    %1 = arith.muli %0, %c1_i32_0 : i32
    %c0_i32 = arith.constant 0 : i32
    return %arg0, %1 : i32, i32
  }
  func.func @transform_2(%arg0: i32, %arg1: i32) -> (i32, i32) {
    %c0_i32 = arith.constant 0 : i32
    return %arg0, %arg1 : i32, i32
  }
  func.func @transform_3(%arg0: i32, %arg1: i32) -> (i32, i32) {
    %c1_i32 = arith.constant 1 : i32
    %0 = arith.addi %arg1, %c1_i32 : i32
    %c1_i32_0 = arith.constant 1 : i32
    %1 = arith.muli %0, %c1_i32_0 : i32
    %c0_i32 = arith.constant 0 : i32
    return %arg0, %1 : i32, i32
  }
  func.func @transform_4(%arg0: i32, %arg1: i32) -> (i32, i32) {
    %c0_i32 = arith.constant 0 : i32
    return %arg0, %arg1 : i32, i32
  }
}

</mosaic_0001>

<llo_original>
// kernel: tpu_custom_call.1
$region0: #{tpu_custom_call.1}
  #allocation0 [shape = 'u32[]', space=smem, size = 0x4, offset = 0x4, fixed_abs, tag = 'smem constant byte address 0x4 - core index']
  #allocation1 [shape = 'u32[72,128]{1,0:T(1,128)}', space=vmem, size = 0x9000, scoped, tag = 'internal scratch']
  %s0 = inlined_call_operand.hbm [shape: f32[8,256], index: 0, kind: input, shape index: {}]
  %s1 = inlined_call_operand.hbm [shape: f32[8,256], index: 1, kind: input, shape index: {}]
  %s2 = inlined_call_operand.hbm [shape: f32[8,256], index: 2, kind: input, shape index: {}]
  %s3 = inlined_call_operand.hbm [shape: f32[8,256], index: 3, kind: input, shape index: {}]
  %s4 = inlined_call_operand.hbm [shape: f32[8,128], index: 4, kind: output, shape index: {}]
  %s5 = sld [smem:[#allocation0]]
  $region42: #{tpu_custom_call.1} parent=0
    _
  %s7 = ssub.s32 1, %s5
  %s8 = scalar_select 0, %s7, %s5
  $region1: #{tpu_custom_call.1} parent=0
    #allocation2 [shape = 'u8[4096]{0}', space=vmem, size = 0x1000, scoped, tag = 'input window, operand 0, single buffered']
    #allocation3 [shape = 's32[1]{0}', space=sflag, size = 0x4, scoped, tag = 'scoped memory for tpu_custom_call.1']
    #allocation4 [shape = 's32[1]{0}', space=sflag, size = 0x4, scoped, tag = 'scoped memory for tpu_custom_call.1']
    #allocation5 [shape = 'u8[4096]{0}', space=vmem, size = 0x1000, scoped, tag = 'input window, operand 1, single buffered']
    #allocation6 [shape = 's32[1]{0}', space=sflag, size = 0x4, scoped, tag = 'scoped memory for tpu_custom_call.1']
    #allocation7 [shape = 'u8[4096]{0}', space=vmem, size = 0x1000, scoped, tag = 'input window, operand 2, single buffered']
    #allocation8 [shape = 'u8[4096]{0}', space=vmem, size = 0x1000, scoped, tag = 'input window, operand 3, single buffered']
    #allocation9 [shape = 's32[1]{0}', space=sflag, size = 0x4, scoped, tag = 'scoped memory for tpu_custom_call.1']
    #allocation10 [shape = 'u8[4096]{0}', space=vmem, size = 0x1000, scoped, tag = 'output window, operand 0, single buffered']
    %9 = vsyncpa [#allocation3], 0
    %10 = vsyncpa [#allocation6], 0
    %11 = vsyncpa [#allocation9], 0
    %12 = vsyncpa [#allocation4], 0
    // Predicated region
    $region2: #{tpu_custom_call.1} parent=1 // pred_check
      _
    $region3: #{tpu_custom_call.1} parent=1 // pred_check_branch
      %14 = sbr.rel (0) target = $region5
    $region4: #{tpu_custom_call.1} parent=1 // pred_region
      %16 = vsyncadd [#allocation3], 0
      %s18 = sshll.u32 %s0, 4
      %s19 = int_to_ptr.hbm [resolvable:$true] %s18
      %s20 = sshll.u32 [#allocation2], 4
      %s21 = int_to_ptr.vmem [resolvable:$true] %s20
      %23 = dma.hbm_to_vmem [thread:$0]  %s19, 128, %s21, [#allocation3]
    $region5: #{tpu_custom_call.1} parent=1 // pred_fallthru
      _
    // Predicated region
    $region6: #{tpu_custom_call.1} parent=1 // pred_check
      _
    $region7: #{tpu_custom_call.1} parent=1 // pred_check_branch
      %25 = sbr.rel (0) target = $region9
    $region8: #{tpu_custom_call.1} parent=1 // pred_region
      %s26 = sadd.s32 0, 1
      %28 = vsyncadd [#allocation6], 0
      %s29 = smul.addr %s26, 8
      %s30 = scalar_lea.hbm %s1, %s29
      %s32 = sshll.u32 %s30, 4
      %s33 = int_to_ptr.hbm [resolvable:$true] %s32
      %s34 = sshll.u32 [#allocation5], 4
      %s35 = int_to_ptr.vmem [resolvable:$true] %s34
      %37 = dma.hbm_to_vmem [thread:$0]  %s33, 128, %s35, [#allocation6]
    $region9: #{tpu_custom_call.1} parent=1 // pred_fallthru
      _
    // Predicated region
    $region10: #{tpu_custom_call.1} parent=1 // pred_check
      _
    $region11: #{tpu_custom_call.1} parent=1 // pred_check_branch
      %39 = sbr.rel (0) target = $region13
    $region12: #{tpu_custom_call.1} parent=1 // pred_region
      %41 = vsyncadd [#allocation6], 0
      %s43 = sshll.u32 %s2, 4
      %s44 = int_to_ptr.hbm [resolvable:$true] %s43
      %s45 = sshll.u32 [#allocation7], 4
      %s46 = int_to_ptr.vmem [resolvable:$true] %s45
      %48 = dma.hbm_to_vmem [thread:$0]  %s44, 128, %s46, [#allocation6]
    $region13: #{tpu_custom_call.1} parent=1 // pred_fallthru
      _
    // Predicated region
    $region14: #{tpu_custom_call.1} parent=1 // pred_check
      _
    $region15: #{tpu_custom_call.1} parent=1 // pred_check_branch
      %50 = sbr.rel (0) target = $region17
    $region16: #{tpu_custom_call.1} parent=1 // pred_region
      %s51 = sadd.s32 0, 1
      %53 = vsyncadd [#allocation9], 0
      %s54 = smul.addr %s51, 8
      %s55 = scalar_lea.hbm %s3, %s54
      %s57 = sshll.u32 %s55, 4
      %s58 = int_to_ptr.hbm [resolvable:$true] %s57
      %s59 = sshll.u32 [#allocation8], 4
      %s60 = int_to_ptr.vmem [resolvable:$true] %s59
      %62 = dma.hbm_to_vmem [thread:$0]  %s58, 128, %s60, [#allocation9]
    $region17: #{tpu_custom_call.1} parent=1 // pred_fallthru
      _
    // Predicated region
    $region18: #{tpu_custom_call.1} parent=1 // pred_check
      _
    $region19: #{tpu_custom_call.1} parent=1 // pred_check_branch
      %64 = sbr.rel (0) target = $region21
    $region20: #{tpu_custom_call.1} parent=1 // pred_region
      %66 = dma.done [#allocation3], 128
    $region21: #{tpu_custom_call.1} parent=1 // pred_fallthru
      _
    // Predicated region
    $region22: #{tpu_custom_call.1} parent=1 // pred_check
      _
    $region23: #{tpu_custom_call.1} parent=1 // pred_check_branch
      %68 = sbr.rel (0) target = $region25
    $region24: #{tpu_custom_call.1} parent=1 // pred_region
      %70 = dma.done [#allocation6], 128
    $region25: #{tpu_custom_call.1} parent=1 // pred_fallthru
      _
    // Predicated region
    $region26: #{tpu_custom_call.1} parent=1 // pred_check
      _
    $region27: #{tpu_custom_call.1} parent=1 // pred_check_branch
      %72 = sbr.rel (0) target = $region29
    $region28: #{tpu_custom_call.1} parent=1 // pred_region
      %74 = dma.done [#allocation6], 128
    $region29: #{tpu_custom_call.1} parent=1 // pred_fallthru
      _
    // Predicated region
    $region30: #{tpu_custom_call.1} parent=1 // pred_check
      _
    $region31: #{tpu_custom_call.1} parent=1 // pred_check_branch
      %76 = sbr.rel (0) target = $region33
    $region32: #{tpu_custom_call.1} parent=1 // pred_region
      %78 = dma.done [#allocation9], 128
    $region33: #{tpu_custom_call.1} parent=1 // pred_fallthru
      _
    %s79 = sadd.s32 0, 1
    %s80 = sadd.s32 0, 1
    %v81 = vld [vmem:[#allocation2] sm:$0xff]
    %v82 = vld [vmem:[#allocation7] sm:$0xff]
    %v83 = vld [vmem:[#allocation5] sm:$0xff]
    %v84 = vld [vmem:[#allocation8] sm:$0xff]
    %85 = vrot.lane.b32.xlu0 %v82, 123
    %v86 = vpop.permute.xlu0 %85
    %87 = vrot.lane.b32.xlu0 %v84, 123
    %v88 = vpop.permute.xlu0 %87
    %v89 = vlaneseq
    %v90 = vand.u32 %v89, 127
    %vm91 = vcmp.lt.s32.totalorder %v90, 123
    %v92 = vsel %vm91, %v86, %v88
    %v93 = vadd.f32 %v81, %v92
    %v94 = vmul.f32 %v93, 0.0020289666
    %95 = vrot.lane.b32.xlu0 %v81, 127
    %v96 = vpop.permute.xlu0 %95
    %97 = vrot.lane.b32.xlu0 %v83, 127
    %v98 = vpop.permute.xlu0 %97
    %vm99 = vcmp.lt.s32.totalorder %v90, 127
    %v100 = vsel %vm99, %v96, %v98
    %101 = vrot.lane.b32.xlu0 %v82, 124
    %v102 = vpop.permute.xlu0 %101
    %103 = vrot.lane.b32.xlu0 %v84, 124
    %v104 = vpop.permute.xlu0 %103
    %vm105 = vcmp.lt.s32.totalorder %v90, 124
    %v106 = vsel %vm105, %v102, %v104
    %v107 = vadd.f32 %v100, %v106
    %v108 = vmul.f32 %v107, -0.025543464
    %v109 = vadd.f32 %v94, %v108
    %110 = vrot.lane.b32.xlu0 %v81, 126
    %v111 = vpop.permute.xlu0 %110
    %112 = vrot.lane.b32.xlu0 %v83, 126
    %v113 = vpop.permute.xlu0 %112
    %vm114 = vcmp.lt.s32.totalorder %v90, 126
    %v115 = vsel %vm114, %v111, %v113
    %116 = vrot.lane.b32.xlu0 %v82, 125
    %v117 = vpop.permute.xlu0 %116
    %118 = vrot.lane.b32.xlu0 %v84, 125
    %v119 = vpop.permute.xlu0 %118
    %vm120 = vcmp.lt.s32.totalorder %v90, 125
    %v121 = vsel %vm120, %v117, %v119
    %v122 = vadd.f32 %v115, %v121
    %v123 = vmul.f32 %v122, 0.12857261
    %v124 = vadd.f32 %v109, %v123
    %125 = vrot.lane.b32.xlu0 %v81, 125
    %v126 = vpop.permute.xlu0 %125
    %127 = vrot.lane.b32.xlu0 %v83, 125
    %v128 = vpop.permute.xlu0 %127
    %v129 = vsel %vm120, %v126, %v128
    %130 = vrot.lane.b32.xlu0 %v82, 126
    %v131 = vpop.permute.xlu0 %130
    %132 = vrot.lane.b32.xlu0 %v84, 126
    %v133 = vpop.permute.xlu0 %132
    %v134 = vsel %vm114, %v131, %v133
    %v135 = vadd.f32 %v129, %v134
    %v136 = vmul.f32 %v135, 0.4432098
    %v137 = vadd.f32 %v124, %v136
    %138 = vrot.lane.b32.xlu0 %v81, 124
    %v139 = vpop.permute.xlu0 %138
    %140 = vrot.lane.b32.xlu0 %v83, 124
    %v141 = vpop.permute.xlu0 %140
    %v142 = vsel %vm105, %v139, %v141
    %143 = vrot.lane.b32.xlu0 %v82, 127
    %v144 = vpop.permute.xlu0 %143
    %145 = vrot.lane.b32.xlu0 %v84, 127
    %v146 = vpop.permute.xlu0 %145
    %v147 = vsel %vm99, %v144, %v146
    %v148 = vadd.f32 %v142, %v147
    %v149 = vmul.f32 %v148, -0.057657376
    %v150 = vadd.f32 %v137, %v149
    %151 = vrot.lane.b32.xlu0 %v81, 123
    %v152 = vpop.permute.xlu0 %151
    %153 = vrot.lane.b32.xlu0 %v83, 123
    %v154 = vpop.permute.xlu0 %153
    %v155 = vsel %vm91, %v152, %v154
    %v156 = vadd.f32 %v155, %v82
    %v157 = vmul.f32 %v156, 0.009389464
    %v158 = vadd.f32 %v150, %v157
    %159 = vst [vmem:[#allocation10] sm:$0xff] %v158
    // Predicated region
    $region34: #{tpu_custom_call.1} parent=1 // pred_check
      _
    $region35: #{tpu_custom_call.1} parent=1 // pred_check_branch
      %161 = sbr.rel (0) target = $region37
    $region36: #{tpu_custom_call.1} parent=1 // pred_region
      %163 = vsyncadd [#allocation4], 0
      %s165 = sshll.u32 [#allocation10], 4
      %s166 = int_to_ptr.vmem [resolvable:$true] %s165
      %s167 = sshll.u32 %s4, 4
      %s168 = int_to_ptr.hbm [resolvable:$true] %s167
      %170 = dma.vmem_to_hbm [thread:$0]  %s166, 128, %s168, [#allocation4]
    $region37: #{tpu_custom_call.1} parent=1 // pred_fallthru
      _
    // Predicated region
    $region38: #{tpu_custom_call.1} parent=1 // pred_check
      _
    $region39: #{tpu_custom_call.1} parent=1 // pred_check_branch
      %172 = sbr.rel (0) target = $region41
    $region40: #{tpu_custom_call.1} parent=1 // pred_region
      %174 = dma.done [#allocation4], 128
    $region41: #{tpu_custom_call.1} parent=1 // pred_fallthru
      _
    %175 = vsyncpa [#allocation3], 1
    %176 = vsyncpa [#allocation6], 1
    %177 = vsyncpa [#allocation9], 1
    %178 = vsyncpa [#allocation4], 1

</llo_original>
